<compile_context>
chip_gen: v7x
topology: tpu7x:2x2x1
jax: 0.10.0
libtpu: 0.0.40
codegen_flags: <defaults>
</compile_context>

<pallas_src>
from functools import partial

import numpy as np
import jax
import jax.numpy as jnp
from jax.experimental import pallas as pl
from jax.experimental.pallas import tpu as pltpu


def _attention_kernel(x_ref, w1_ref, b1_ref, w2_ref, b2_ref, o_ref, *, C, HW, mid):
    # x_ref block: (NB, C*HW) -- batch rows on sublanes, channel-major lanes.
    # 1) mean over channels: average the C lane segments (pure VPU adds).
    m = x_ref[:, 0:HW]
    for c in range(1, C):
        m = m + x_ref[:, c * HW:(c + 1) * HW]
    m = m * (1.0 / C)                                    # (NB, HW)

    # 2) conv1 (1x1, 1->mid) + ReLU, then conv2 (1x1, mid->1): scalar weights
    #    read from SMEM, evaluated on the VPU.  mid = C // reduction is tiny,
    #    so a matmul would badly underfill the MXU for zero benefit.
    acc = None
    for j in range(mid):
        h = jnp.maximum(w1_ref[j] * m + b1_ref[j], 0.0)
        t = w2_ref[j] * h
        acc = t if acc is None else acc + t
    a = jax.nn.sigmoid(acc + b2_ref[0])                  # (NB, HW) attention map

    # 3) x * attention map, broadcast over channels: one lane-dense store per
    #    channel segment (width HW, a multiple of 128 -> unmasked vst).
    for c in range(C):
        o_ref[:, c * HW:(c + 1) * HW] = x_ref[:, c * HW:(c + 1) * HW] * a


def _pick_batch_block(N, row_bytes, budget_bytes=1 << 20):
    """Largest divisor of N keeping the block <= budget_bytes, with the sublane
    block dim either 8-aligned or spanning the full batch axis (the (8,128)
    BlockSpec rule).  ~1 MiB blocks keep 4x double-buffering well inside even
    v5e's 16 MiB default scoped-VMEM limit."""
    candidates = [nb for nb in range(1, N + 1)
                  if N % nb == 0 and (nb == N or nb % 8 == 0)]
    fitting = [nb for nb in candidates if nb * row_bytes <= budget_bytes]
    return max(fitting) if fitting else min(candidates)


def attention_forward(x, w1, b1, w2, b2):
    """x: (N, C, H, W) f32.  w1: (mid, 1), b1: (mid,), w2: (1, mid), b2: (1,)."""
    N, C, H, W = x.shape
    HW = H * W
    mid = w1.shape[0]
    out_c = w2.shape[0]
    assert out_c == 1, "spatial attention map must have a single output channel"
    assert mid >= 1

    x2 = x.reshape(N, C * HW)                 # free: NCHW is already contiguous
    w1f = w1.reshape(mid)
    b1f = b1.reshape(mid)
    w2f = w2.reshape(mid)
    b2f = b2.reshape(1)

    nb = _pick_batch_block(N, C * HW * x.dtype.itemsize)
    grid = (N // nb,)

    smem = pl.BlockSpec(memory_space=pltpu.MemorySpace.SMEM)
    y = pl.pallas_call(
        partial(_attention_kernel, C=C, HW=HW, mid=mid),
        out_shape=jax.ShapeDtypeStruct((N, C * HW), x.dtype),
        grid=grid,
        in_specs=[
            pl.BlockSpec((nb, C * HW), lambda i: (i, 0)),   # NB batch rows of x
            smem, smem, smem, smem,                         # w1, b1, w2, b2
        ],
        out_specs=pl.BlockSpec((nb, C * HW), lambda i: (i, 0)),
        compiler_params=pltpu.CompilerParams(
            dimension_semantics=("parallel",)),
    )(x2, w1f, b1f, w2f, b2f)
    return y.reshape(N, C, H, W)


def attention_reference(x, w1, b1, w2, b2):
    """Pure-JAX reference of the same forward pass."""
    m = jnp.mean(x, axis=1, keepdims=True)                            # (N,1,H,W)
    h = jnp.einsum('oc,nchw->nohw', w1, m) + b1[None, :, None, None]
    h = jnp.maximum(h, 0.0)
    a = jnp.einsum('oc,nchw->nohw', w2, h) + b2[None, :, None, None]
    a = jax.nn.sigmoid(a)
    return x * a


if __name__ == "__main__":
    # Module config: in_channels=4, out_channels=1, reduction=4 -> mid = 1
    N, C, H, W = 2, 4, 16, 16
    reduction = 4
    mid = C // reduction          # 1
    out_c = 1

    key = jax.random.PRNGKey(0)
    kx, kw1, kb1, kw2, kb2 = jax.random.split(key, 5)

    x = jax.random.normal(kx, (N, C, H, W), dtype=jnp.float32)
    # 1x1 conv weights stored as (C_out, C_in) matrices (kernel spatial dims are 1).
    w1 = jax.random.normal(kw1, (mid, 1), dtype=jnp.float32) * 0.5
    b1 = jax.random.normal(kb1, (mid,), dtype=jnp.float32) * 0.1
    w2 = jax.random.normal(kw2, (out_c, mid), dtype=jnp.float32) * 0.5
    b2 = jax.random.normal(kb2, (out_c,), dtype=jnp.float32) * 0.1

    y = attention_forward(x, w1, b1, w2, b2)
    jax.block_until_ready(y)

    y_ref = attention_reference(x, w1, b1, w2, b2)
    np.testing.assert_allclose(np.asarray(y), np.asarray(y_ref), rtol=1e-5, atol=1e-5)

    print("KERNEL_OK")
</pallas_src>

<mosaic_0001>
module attributes {stable_mosaic.version = 11 : i64} {
  func.func @_attention_kernel(%arg0: i32, %arg1: memref<2x1024xf32, #tpu.memory_space<vmem>>, %arg2: memref<1xf32, #tpu.memory_space<smem>>, %arg3: memref<1xf32, #tpu.memory_space<smem>>, %arg4: memref<1xf32, #tpu.memory_space<smem>>, %arg5: memref<1xf32, #tpu.memory_space<smem>>, %arg6: memref<2x1024xf32, #tpu.memory_space<vmem>>) attributes {dimension_semantics = [#tpu.dimension_semantics<parallel>], iteration_bounds = array<i64: 1>, scalar_prefetch = 0 : i64, scratch_operands = 0 : i64, tpu.core_type = #tpu.core_type<tc>, window_params = [{transform_indices = @transform_0, window_bounds = array<i64: 2, 1024>}, {transform_indices = @transform_1, window_bounds = array<i64: 1>}, {transform_indices = @transform_2, window_bounds = array<i64: 1>}, {transform_indices = @transform_3, window_bounds = array<i64: 1>}, {transform_indices = @transform_4, window_bounds = array<i64: 1>}, {transform_indices = @transform_5, window_bounds = array<i64: 2, 1024>}]} {
    %c0 = arith.constant 0 : index
    %c0_0 = arith.constant 0 : index
    %0 = vector.load %arg1[%c0, %c0_0] : memref<2x1024xf32, #tpu.memory_space<vmem>>, vector<2x256xf32>
    %c0_1 = arith.constant 0 : index
    %c256 = arith.constant 256 : index
    %1 = vector.load %arg1[%c0_1, %c256] : memref<2x1024xf32, #tpu.memory_space<vmem>>, vector<2x256xf32>
    %2 = arith.addf %0, %1 : vector<2x256xf32>
    %c0_2 = arith.constant 0 : index
    %c512 = arith.constant 512 : index
    %3 = vector.load %arg1[%c0_2, %c512] : memref<2x1024xf32, #tpu.memory_space<vmem>>, vector<2x256xf32>
    %4 = arith.addf %2, %3 : vector<2x256xf32>
    %c0_3 = arith.constant 0 : index
    %c768 = arith.constant 768 : index
    %5 = vector.load %arg1[%c0_3, %c768] : memref<2x1024xf32, #tpu.memory_space<vmem>>, vector<2x256xf32>
    %6 = arith.addf %4, %5 : vector<2x256xf32>
    %cst = arith.constant 2.500000e-01 : f32
    %7 = vector.broadcast %cst : f32 to vector<2x256xf32>
    %8 = arith.mulf %6, %7 : vector<2x256xf32>
    %c0_4 = arith.constant 0 : index
    %9 = memref.load %arg2[%c0_4] : memref<1xf32, #tpu.memory_space<smem>>
    %10 = vector.broadcast %9 : f32 to vector<2x256xf32>
    %11 = arith.mulf %10, %8 : vector<2x256xf32>
    %c0_5 = arith.constant 0 : index
    %12 = memref.load %arg3[%c0_5] : memref<1xf32, #tpu.memory_space<smem>>
    %13 = vector.broadcast %12 : f32 to vector<2x256xf32>
    %14 = arith.addf %11, %13 : vector<2x256xf32>
    %cst_6 = arith.constant 0.000000e+00 : f32
    %15 = vector.broadcast %cst_6 : f32 to vector<2x256xf32>
    %16 = arith.maximumf %14, %15 : vector<2x256xf32>
    %c0_7 = arith.constant 0 : index
    %17 = memref.load %arg4[%c0_7] : memref<1xf32, #tpu.memory_space<smem>>
    %18 = vector.broadcast %17 : f32 to vector<2x256xf32>
    %19 = arith.mulf %18, %16 : vector<2x256xf32>
    %c0_8 = arith.constant 0 : index
    %20 = memref.load %arg5[%c0_8] : memref<1xf32, #tpu.memory_space<smem>>
    %21 = vector.broadcast %20 : f32 to vector<2x256xf32>
    %22 = arith.addf %19, %21 : vector<2x256xf32>
    %23 = arith.negf %22 : vector<2x256xf32>
    %24 = math.exp %23 : vector<2x256xf32>
    %cst_9 = arith.constant 1.000000e+00 : f32
    %25 = vector.broadcast %cst_9 : f32 to vector<2x256xf32>
    %26 = arith.addf %25, %24 : vector<2x256xf32>
    %27 = arith.divf %25, %26 : vector<2x256xf32>
    %c0_10 = arith.constant 0 : index
    %c0_11 = arith.constant 0 : index
    %28 = vector.load %arg1[%c0_10, %c0_11] : memref<2x1024xf32, #tpu.memory_space<vmem>>, vector<2x256xf32>
    %29 = arith.mulf %28, %27 : vector<2x256xf32>
    %c0_12 = arith.constant 0 : index
    %c0_13 = arith.constant 0 : index
    %30 = vector.load %arg6[%c0_12, %c0_13] : memref<2x1024xf32, #tpu.memory_space<vmem>>, vector<2x256xf32>
    tpu.vector_store %arg6[%c0_12, %c0_13], %29 {strides = array<i32>} : memref<2x1024xf32, #tpu.memory_space<vmem>>, vector<2x256xf32>,
    %c0_14 = arith.constant 0 : index
    %c256_15 = arith.constant 256 : index
    %31 = vector.load %arg1[%c0_14, %c256_15] : memref<2x1024xf32, #tpu.memory_space<vmem>>, vector<2x256xf32>
    %32 = arith.mulf %31, %27 : vector<2x256xf32>
    %c0_16 = arith.constant 0 : index
    %c256_17 = arith.constant 256 : index
    %33 = vector.load %arg6[%c0_16, %c256_17] : memref<2x1024xf32, #tpu.memory_space<vmem>>, vector<2x256xf32>
    tpu.vector_store %arg6[%c0_16, %c256_17], %32 {strides = array<i32>} : memref<2x1024xf32, #tpu.memory_space<vmem>>, vector<2x256xf32>,
    %c0_18 = arith.constant 0 : index
    %c512_19 = arith.constant 512 : index
    %34 = vector.load %arg1[%c0_18, %c512_19] : memref<2x1024xf32, #tpu.memory_space<vmem>>, vector<2x256xf32>
    %35 = arith.mulf %34, %27 : vector<2x256xf32>
    %c0_20 = arith.constant 0 : index
    %c512_21 = arith.constant 512 : index
    %36 = vector.load %arg6[%c0_20, %c512_21] : memref<2x1024xf32, #tpu.memory_space<vmem>>, vector<2x256xf32>
    tpu.vector_store %arg6[%c0_20, %c512_21], %35 {strides = array<i32>} : memref<2x1024xf32, #tpu.memory_space<vmem>>, vector<2x256xf32>,
    %c0_22 = arith.constant 0 : index
    %c768_23 = arith.constant 768 : index
    %37 = vector.load %arg1[%c0_22, %c768_23] : memref<2x1024xf32, #tpu.memory_space<vmem>>, vector<2x256xf32>
    %38 = arith.mulf %37, %27 : vector<2x256xf32>
    %c0_24 = arith.constant 0 : index
    %c768_25 = arith.constant 768 : index
    %39 = vector.load %arg6[%c0_24, %c768_25] : memref<2x1024xf32, #tpu.memory_space<vmem>>, vector<2x256xf32>
    tpu.vector_store %arg6[%c0_24, %c768_25], %38 {strides = array<i32>} : memref<2x1024xf32, #tpu.memory_space<vmem>>, vector<2x256xf32>,
    return
  }
  func.func @transform_0(%arg0: i32) -> (i32, i32) {
    %c0_i32 = arith.constant 0 : i32
    %c0_i32_0 = arith.constant 0 : i32
    return %arg0, %c0_i32 : i32, i32
  }
  func.func @transform_1(%arg0: i32) -> i32 {
    %c0_i32 = arith.constant 0 : i32
    %c0_i32_0 = arith.constant 0 : i32
    return %c0_i32 : i32
  }
  func.func @transform_2(%arg0: i32) -> i32 {
    %c0_i32 = arith.constant 0 : i32
    %c0_i32_0 = arith.constant 0 : i32
    return %c0_i32 : i32
  }
  func.func @transform_3(%arg0: i32) -> i32 {
    %c0_i32 = arith.constant 0 : i32
    %c0_i32_0 = arith.constant 0 : i32
    return %c0_i32 : i32
  }
  func.func @transform_4(%arg0: i32) -> i32 {
    %c0_i32 = arith.constant 0 : i32
    %c0_i32_0 = arith.constant 0 : i32
    return %c0_i32 : i32
  }
  func.func @transform_5(%arg0: i32) -> (i32, i32) {
    %c0_i32 = arith.constant 0 : i32
    %c0_i32_0 = arith.constant 0 : i32
    return %arg0, %c0_i32 : i32, i32
  }
}

</mosaic_0001>

<llo_original>
// kernel: tpu_custom_call.1
$region0: #{tpu_custom_call.1}
  #allocation0 [shape = 'u32[]', space=smem, size = 0x4, offset = 0x4, fixed_abs, tag = 'smem constant byte address 0x4 - core index']
  #allocation1 [shape = 'u32[144,128]{1,0:T(1,128)}', space=vmem, size = 0x12000, scoped, tag = 'internal scratch']
  #allocation2 [shape = 'f32[1]{0:T(128)S(6)}', space=smem, size = 0x200, scoped, tag = 'scoped memory for tpu_custom_call.1']
  #allocation3 [shape = 'f32[1]{0:T(128)S(6)}', space=smem, size = 0x200, scoped, tag = 'scoped memory for tpu_custom_call.1']
  #allocation4 [shape = 'f32[1]{0:T(128)S(6)}', space=smem, size = 0x200, scoped, tag = 'scoped memory for tpu_custom_call.1']
  #allocation5 [shape = 'f32[1]{0:T(128)S(6)}', space=smem, size = 0x200, scoped, tag = 'scoped memory for tpu_custom_call.1']
  %s0 = inlined_call_operand.hbm [shape: f32[2,1024], index: 0, kind: input, shape index: {}]
  %s1 = inlined_call_operand.<no memory space> [shape: f32[1], index: 1, kind: input, shape index: {}]
  %s2 = inlined_call_operand.<no memory space> [shape: f32[1], index: 2, kind: input, shape index: {}]
  %s3 = inlined_call_operand.<no memory space> [shape: f32[1], index: 3, kind: input, shape index: {}]
  %s4 = inlined_call_operand.<no memory space> [shape: f32[1], index: 4, kind: input, shape index: {}]
  %s5 = inlined_call_operand.hbm [shape: f32[2,1024], index: 5, kind: output, shape index: {}]
  %s6 = sld [smem:[#allocation0]]
  $region34: #{tpu_custom_call.1} parent=0
    _
  %s8 = ssub.s32 1, %s6
  %s9 = scalar_select 0, %s8, %s6
  %10 = sst [smem:[#allocation2]] %s1
  %11 = sst [smem:[#allocation3]] %s2
  %12 = sst [smem:[#allocation4]] %s3
  %13 = sst [smem:[#allocation5]] %s4
  $region1: #{tpu_custom_call.1} parent=0
    #allocation6 [shape = 'u8[8192]{0}', space=vmem, size = 0x2000, scoped, tag = 'input window, operand 0, single buffered']
    #allocation7 [shape = 's32[1]{0}', space=sflag, size = 0x4, scoped, tag = 'scoped memory for tpu_custom_call.1']
    #allocation8 [shape = 's32[1]{0}', space=sflag, size = 0x4, scoped, tag = 'scoped memory for tpu_custom_call.1']
    #allocation9 [shape = 'u8[8192]{0}', space=vmem, size = 0x2000, scoped, tag = 'output window, operand 0, single buffered']
    %14 = vsyncpa [#allocation7], 0
    %15 = vsyncpa [#allocation8], 0
    // Predicated region
    $region2: #{tpu_custom_call.1} parent=1 // pred_check
      _
    $region3: #{tpu_custom_call.1} parent=1 // pred_check_branch
      %17 = sbr.rel (0) target = $region5
    $region4: #{tpu_custom_call.1} parent=1 // pred_region
      %s19 = ssub.s32 256, 256
      %20 = vsyncadd [#allocation7], %s19
      %s22 = sshll.u32 [#allocation6], 4
      %s23 = int_to_ptr.vmem [resolvable:$true] %s22
      %25 = dma.hbm_to_vmem [thread:$0]  %s0, 256, %s23, [#allocation7]
    $region5: #{tpu_custom_call.1} parent=1 // pred_fallthru
      _
    // Predicated region
    $region6: #{tpu_custom_call.1} parent=1 // pred_check
      _
    $region7: #{tpu_custom_call.1} parent=1 // pred_check_branch
      %27 = sbr.rel (0) target = $region9
    $region8: #{tpu_custom_call.1} parent=1 // pred_region
      _
    $region9: #{tpu_custom_call.1} parent=1 // pred_fallthru
      _
    // Predicated region
    $region10: #{tpu_custom_call.1} parent=1 // pred_check
      _
    $region11: #{tpu_custom_call.1} parent=1 // pred_check_branch
      %29 = sbr.rel (0) target = $region13
    $region12: #{tpu_custom_call.1} parent=1 // pred_region
      _
    $region13: #{tpu_custom_call.1} parent=1 // pred_fallthru
      _
    // Predicated region
    $region14: #{tpu_custom_call.1} parent=1 // pred_check
      _
    $region15: #{tpu_custom_call.1} parent=1 // pred_check_branch
      %31 = sbr.rel (0) target = $region17
    $region16: #{tpu_custom_call.1} parent=1 // pred_region
      _
    $region17: #{tpu_custom_call.1} parent=1 // pred_fallthru
      _
    // Predicated region
    $region18: #{tpu_custom_call.1} parent=1 // pred_check
      _
    $region19: #{tpu_custom_call.1} parent=1 // pred_check_branch
      %33 = sbr.rel (0) target = $region21
    $region20: #{tpu_custom_call.1} parent=1 // pred_region
      _
    $region21: #{tpu_custom_call.1} parent=1 // pred_fallthru
      _
    // Predicated region
    $region22: #{tpu_custom_call.1} parent=1 // pred_check
      _
    $region23: #{tpu_custom_call.1} parent=1 // pred_check_branch
      %35 = sbr.rel (0) target = $region25
    $region24: #{tpu_custom_call.1} parent=1 // pred_region
      %36 = dma.done [#allocation7], 256
    $region25: #{tpu_custom_call.1} parent=1 // pred_fallthru
      _
    %v37 = vld [vmem:[#allocation6] sm:$0xf]
    %v38 = vld [vmem:[#allocation6 + $0x4] sm:$0xf]
    %v39 = vadd.f32 %v37, %v38
    %v40 = vld [vmem:[#allocation6 + $0x8] sm:$0xf]
    %v41 = vadd.f32 %v39, %v40
    %v42 = vld [vmem:[#allocation6 + $0xc] sm:$0xf]
    %v43 = vadd.f32 %v41, %v42
    %v44 = vmul.f32 %v43, 0.25
    %s45 = sld [smem:[#allocation2]]
    %v46 = vstv %s45
    %v47 = vmul.f32 %v46, %v44
    %s48 = sld [smem:[#allocation3]]
    %v49 = vstv %s48
    %v50 = vadd.f32 %v47, %v49
    %v51 = vmax.f32 %v50, 0.0
    %s52 = sld [smem:[#allocation4]]
    %v53 = vstv %s52
    %v54 = vmul.f32 %v53, %v51
    %s55 = sld [smem:[#allocation5]]
    %v56 = vstv %s55
    %v57 = vadd.f32 %v54, %v56
    %v58 = vxor.u32 %v57, 2147483648
    %v59 = vmul.f32 %v58, 1.442695
    %v60 = vpow.pop %v59
    %v61 = vadd.f32 %v60, 1.0
    %v62 = vrcp.pop %v61
    %v63 = vmul.f32 1.0, %v62
    %v64 = vmul.f32 %v37, %v63
    %65 = vst [vmem:[#allocation9] sm:$0xf] %v64
    %v66 = vld [vmem:[#allocation6 + $0x4] sm:$0xf]
    %v67 = vmul.f32 %v66, %v63
    %68 = vst [vmem:[#allocation9 + $0x4] sm:$0xf] %v67
    %v69 = vld [vmem:[#allocation6 + $0x8] sm:$0xf]
    %v70 = vmul.f32 %v69, %v63
    %71 = vst [vmem:[#allocation9 + $0x8] sm:$0xf] %v70
    %v72 = vld [vmem:[#allocation6 + $0xc] sm:$0xf]
    %v73 = vmul.f32 %v72, %v63
    %74 = vst [vmem:[#allocation9 + $0xc] sm:$0xf] %v73
    // Predicated region
    $region26: #{tpu_custom_call.1} parent=1 // pred_check
      _
    $region27: #{tpu_custom_call.1} parent=1 // pred_check_branch
      %76 = sbr.rel (0) target = $region29
    $region28: #{tpu_custom_call.1} parent=1 // pred_region
      %s78 = ssub.s32 256, 256
      %79 = vsyncadd [#allocation8], %s78
      %s81 = sshll.u32 [#allocation9], 4
      %s82 = int_to_ptr.vmem [resolvable:$true] %s81
      %84 = dma.vmem_to_hbm [thread:$0]  %s82, 256, %s5, [#allocation8]
    $region29: #{tpu_custom_call.1} parent=1 // pred_fallthru
      _
    // Predicated region
    $region30: #{tpu_custom_call.1} parent=1 // pred_check
      _
    $region31: #{tpu_custom_call.1} parent=1 // pred_check_branch
      %86 = sbr.rel (0) target = $region33
    $region32: #{tpu_custom_call.1} parent=1 // pred_region
      %87 = dma.done [#allocation8], 256
    $region33: #{tpu_custom_call.1} parent=1 // pred_fallthru
      _
    %88 = vsyncpa [#allocation7], 1
    %89 = vsyncpa [#allocation8], 1

</llo_original>
